<compile_context>
chip_gen: v7x
topology: tpu7x:2x2x1
jax: 0.10.0
libtpu: 0.0.40
codegen_flags: <defaults>
</compile_context>

<pallas_src>
import jax
import jax.numpy as jnp
from jax.experimental import pallas as pl
from jax.experimental.pallas import tpu as pltpu


def _cat_kernel(x1_ref, x2_ref, o_ref):
    # x1_ref: (C1, col_t), x2_ref: (C2, col_t), o_ref: (C1+C2, col_t).
    # The concat split lives on the sublane axis; the lane axis is always the
    # full tile width, so both stores are unmasked lane-dense copies.
    c1 = x1_ref.shape[0]
    o_ref[:c1, :] = x1_ref[...]
    o_ref[c1:, :] = x2_ref[...]


def _pick_col_tile(hw: int, c_total: int, itemsize: int) -> int:
    """Largest multiple-of-128 divisor of hw whose working set stays small."""
    if hw % 128 != 0:
        # Lane axis not 128-aligned: use the full extent (allowed because the
        # block equals the full array dim); Mosaic pads lanes internally.
        return hw
    # Per-pipeline-slot budget for the (x1 + x2 + out) tiles; double buffering
    # doubles this, so keep it comfortably below the scoped VMEM limit.
    slot_budget = 8 * 1024 * 1024
    max_cols = max(128, slot_budget // max(1, 2 * c_total * itemsize))
    best = 128
    cand = 128
    while cand <= hw:
        if hw % cand == 0 and cand <= max_cols:
            best = cand
        cand += 128
    return best


def cat_channels(x1: jax.Array, x2: jax.Array) -> jax.Array:
    """Equivalent of torch.cat([x1, x2], dim=1) for NCHW tensors."""
    assert x1.ndim == x2.ndim == 4, "expected NCHW inputs"
    b, c1, h, w = x1.shape
    b2, c2, h2, w2 = x2.shape
    assert (b, h, w) == (b2, h2, w2), "non-concat dims must match"
    assert x1.dtype == x2.dtype
    c_out = c1 + c2
    hw = h * w

    # Metadata-only reshapes: (B, C, H, W) -> (B, C, H*W).
    x1_3d = x1.reshape(b, c1, hw)
    x2_3d = x2.reshape(b, c2, hw)

    itemsize = jnp.dtype(x1.dtype).itemsize
    col_t = _pick_col_tile(hw, c_out, itemsize)
    n_col = hw // col_t

    # Double-buffered (x1 + x2 + out) tiles plus headroom.  Raise the scoped
    # VMEM limit above v5e's 16 MiB default, but cap at 32 MiB so the same
    # config is safe on v7x's 64 MiB physical VMEM.
    block_bytes = 2 * c_out * col_t * itemsize
    vmem_limit = int(min(max(4 * block_bytes, 16 * 1024 * 1024),
                         32 * 1024 * 1024))

    out_3d = pl.pallas_call(
        _cat_kernel,
        out_shape=jax.ShapeDtypeStruct((b, c_out, hw), x1.dtype),
        grid=(b, n_col),
        in_specs=[
            # Batch dim squeezed (None); channels at full extent (legal block
            # shape even when C is not a multiple of 8); lane tiles of col_t.
            pl.BlockSpec((None, c1, col_t), lambda i, j: (i, 0, j)),
            pl.BlockSpec((None, c2, col_t), lambda i, j: (i, 0, j)),
        ],
        out_specs=pl.BlockSpec((None, c_out, col_t), lambda i, j: (i, 0, j)),
        compiler_params=pltpu.CompilerParams(
            dimension_semantics=("parallel", "parallel"),
            vmem_limit_bytes=vmem_limit,
        ),
    )(x1_3d, x2_3d)

    return out_3d.reshape(b, c_out, h, w)


if __name__ == "__main__":
    key = jax.random.PRNGKey(0)
    k1, k2 = jax.random.split(key)

    # Small NCHW test shapes; channel counts differ to exercise a true concat.
    x1 = jax.random.normal(k1, (2, 4, 16, 16), dtype=jnp.float32)
    x2 = jax.random.normal(k2, (2, 6, 16, 16), dtype=jnp.float32)

    out = jax.block_until_ready(cat_channels(x1, x2))

    # Sanity check against the reference semantics of torch.cat(dim=1).
    ref = jnp.concatenate([x1, x2], axis=1)
    assert out.shape == (2, 10, 16, 16)
    assert out.dtype == x1.dtype
    assert bool(jnp.array_equal(out, ref))

    print("KERNEL_OK")
</pallas_src>

<mosaic_0001>
module attributes {stable_mosaic.version = 11 : i64} {
  func.func @_cat_kernel(%arg0: i32, %arg1: i32, %arg2: memref<1x4x256xf32, #tpu.memory_space<vmem>>, %arg3: memref<1x6x256xf32, #tpu.memory_space<vmem>>, %arg4: memref<1x10x256xf32, #tpu.memory_space<vmem>>) attributes {dimension_semantics = [#tpu.dimension_semantics<parallel>, #tpu.dimension_semantics<parallel>], iteration_bounds = array<i64: 2, 1>, scalar_prefetch = 0 : i64, scratch_operands = 0 : i64, tpu.core_type = #tpu.core_type<tc>, window_params = [{transform_indices = @transform_0, window_bounds = array<i64: 1, 4, 256>}, {transform_indices = @transform_1, window_bounds = array<i64: 1, 6, 256>}, {transform_indices = @transform_2, window_bounds = array<i64: 1, 10, 256>}]} {
    %c0 = arith.constant 0 : index
    %c0_0 = arith.constant 0 : index
    %c0_1 = arith.constant 0 : index
    %0 = vector.load %arg2[%c0, %c0_0, %c0_1] : memref<1x4x256xf32, #tpu.memory_space<vmem>>, vector<1x4x256xf32>
    %1 = vector.shape_cast %0 : vector<1x4x256xf32> to vector<4x256xf32>
    %c0_2 = arith.constant 0 : index
    %c0_3 = arith.constant 0 : index
    %c0_4 = arith.constant 0 : index
    %2 = vector.load %arg4[%c0_2, %c0_3, %c0_4] : memref<1x10x256xf32, #tpu.memory_space<vmem>>, vector<1x4x256xf32>
    %3 = vector.shape_cast %2 : vector<1x4x256xf32> to vector<4x256xf32>
    %4 = vector.shape_cast %1 : vector<4x256xf32> to vector<1x4x256xf32>
    tpu.vector_store %arg4[%c0_2, %c0_3, %c0_4], %4 {strides = array<i32>} : memref<1x10x256xf32, #tpu.memory_space<vmem>>, vector<1x4x256xf32>,
    %c0_5 = arith.constant 0 : index
    %c0_6 = arith.constant 0 : index
    %c0_7 = arith.constant 0 : index
    %5 = vector.load %arg3[%c0_5, %c0_6, %c0_7] : memref<1x6x256xf32, #tpu.memory_space<vmem>>, vector<1x6x256xf32>
    %6 = vector.shape_cast %5 : vector<1x6x256xf32> to vector<6x256xf32>
    %c0_8 = arith.constant 0 : index
    %c4 = arith.constant 4 : index
    %c0_9 = arith.constant 0 : index
    %7 = vector.load %arg4[%c0_8, %c4, %c0_9] : memref<1x10x256xf32, #tpu.memory_space<vmem>>, vector<1x6x256xf32>
    %8 = vector.shape_cast %7 : vector<1x6x256xf32> to vector<6x256xf32>
    %9 = vector.shape_cast %6 : vector<6x256xf32> to vector<1x6x256xf32>
    tpu.vector_store %arg4[%c0_8, %c4, %c0_9], %9 {strides = array<i32>} : memref<1x10x256xf32, #tpu.memory_space<vmem>>, vector<1x6x256xf32>,
    return
  }
  func.func @transform_0(%arg0: i32, %arg1: i32) -> (i32, i32, i32) {
    %c0_i32 = arith.constant 0 : i32
    %c0_i32_0 = arith.constant 0 : i32
    return %arg0, %c0_i32, %arg1 : i32, i32, i32
  }
  func.func @transform_1(%arg0: i32, %arg1: i32) -> (i32, i32, i32) {
    %c0_i32 = arith.constant 0 : i32
    %c0_i32_0 = arith.constant 0 : i32
    return %arg0, %c0_i32, %arg1 : i32, i32, i32
  }
  func.func @transform_2(%arg0: i32, %arg1: i32) -> (i32, i32, i32) {
    %c0_i32 = arith.constant 0 : i32
    %c0_i32_0 = arith.constant 0 : i32
    return %arg0, %c0_i32, %arg1 : i32, i32, i32
  }
}

</mosaic_0001>

<llo_original>
// kernel: tpu_custom_call.1
$region0: #{tpu_custom_call.1}
  #allocation0 [shape = 'u32[]', space=smem, size = 0x4, offset = 0x4, fixed_abs, tag = 'smem constant byte address 0x4 - core index']
  #allocation1 [shape = 'u32[144,128]{1,0:T(1,128)}', space=vmem, size = 0x12000, scoped, tag = 'internal scratch']
  %s0 = inlined_call_operand.vmem [shape: f32[2,4,256], index: 0, kind: input, shape index: {}]
  %s1 = inlined_call_operand.vmem [shape: f32[2,6,256], index: 1, kind: input, shape index: {}]
  %s2 = inlined_call_operand.vmem [shape: f32[2,10,256], index: 2, kind: output, shape index: {}]
  %s3 = sld [smem:[#allocation0]]
  $region41: #{tpu_custom_call.1} parent=0
    _
  %s5 = ssub.s32 1, %s3
  %s6 = scalar_select 0, %s5, %s3
  loop: start=0, step=1, limit=4
  $region2: #{tpu_custom_call.1} parent=0 // loop_pre_header
    _
  $region3: #{tpu_custom_call.1} parent=0 // loop_header
    %s8 = sphi 0, %s12
    %p9 = scmp.ge.s32.totalorder %s8, 4
    %s15 = sphi 0, %s27
    %s16 = sphi 0, %s23
    %s17 = sphi 0, %s15
    %s18 = sphi 0, %s16
    %s19 = sphi 0, %s17
    %s20 = sphi 0, %s18
    %s32 = sphi 0, %s34
    %s35 = sphi 0, %s32
    %s36 = sphi 0, %s35
    %s52 = sphi 0, %s36
    %s60 = sphi 0, %s62
    %s63 = sphi 0, %s60
    %s64 = sphi 0, %s63
    %s80 = sphi 0, %s64
    %s88 = sphi 0, %s90
    %s91 = sphi 0, %s88
    %s92 = sphi 0, %s91
    %s108 = sphi 0, %s92
  $region4: #{tpu_custom_call.1} parent=0 // loop_header_branch
    %11 = sbr.rel (%p9) target = $region8
  $region5: #{tpu_custom_call.1} parent=0 // loop_body
    %s13 = ssub.s32 %s8, 1
    %s14 = ssub.s32 %s8, 2
    %s21 = sadd.s32 1, %s16
    %p22 = scmp.ge.s32.totalorder %s21, 1
    %s23 = scalar_select %p22, 0, %s21
    %s24 = sadd.s32 1, %s15
    %s25 = scalar_select %p22, %s24, %s15
    %p26 = scmp.ge.s32.totalorder %s25, 2
    %s27 = scalar_select %p26, 0, %s25
    %s28 = ssub.s32 %s15, %s27
    %s29 = ssub.s32 %s16, %s23
    %s30 = sor.u32 %s28, %s29
    %p31 = scmp.eq.s32.totalorder %s30, 0
    %s33 = sadd.s32 %s32, 1
    %s34 = scalar_select %p31, %s32, %s33
    %p37 = pneg %p31
    %p38 = scmp.eq.s32.totalorder %s8, 1
    %p39 = por %p37, %p38
    %p40 = scmp.ne.s32.totalorder %s32, %s35
    %p41 = scmp.eq.s32.totalorder %s8, 0
    %p42 = por %p40, %p41
    %p43 = scmp.ne.s32.totalorder %s32, %s35
    %p44 = scmp.eq.s32.totalorder %s13, 1
    %p45 = por %p43, %p44
    %p46 = scmp.ne.s32.totalorder %s35, %s36
    %p47 = scmp.eq.s32.totalorder %s13, 0
    %p48 = por %p46, %p47
    %p49 = scmp.ne.s32.totalorder %s35, %s36
    %p50 = scmp.eq.s32.totalorder %s14, 1
    %p51 = por %p49, %p50
    %p53 = scmp.ne.s32.totalorder %s36, %s52
    %p54 = scmp.eq.s32.totalorder %s14, 0
    %p55 = por %p53, %p54
    %s56 = ssub.s32 %s15, %s27
    %s57 = ssub.s32 %s16, %s23
    %s58 = sor.u32 %s56, %s57
    %p59 = scmp.eq.s32.totalorder %s58, 0
    %s61 = sadd.s32 %s60, 1
    %s62 = scalar_select %p59, %s60, %s61
    %p65 = pneg %p59
    %p66 = scmp.eq.s32.totalorder %s8, 1
    %p67 = por %p65, %p66
    %p68 = scmp.ne.s32.totalorder %s60, %s63
    %p69 = scmp.eq.s32.totalorder %s8, 0
    %p70 = por %p68, %p69
    %p71 = scmp.ne.s32.totalorder %s60, %s63
    %p72 = scmp.eq.s32.totalorder %s13, 1
    %p73 = por %p71, %p72
    %p74 = scmp.ne.s32.totalorder %s63, %s64
    %p75 = scmp.eq.s32.totalorder %s13, 0
    %p76 = por %p74, %p75
    %p77 = scmp.ne.s32.totalorder %s63, %s64
    %p78 = scmp.eq.s32.totalorder %s14, 1
    %p79 = por %p77, %p78
    %p81 = scmp.ne.s32.totalorder %s64, %s80
    %p82 = scmp.eq.s32.totalorder %s14, 0
    %p83 = por %p81, %p82
    %s84 = ssub.s32 %s15, %s27
    %s85 = ssub.s32 %s16, %s23
    %s86 = sor.u32 %s84, %s85
    %p87 = scmp.eq.s32.totalorder %s86, 0
    %s89 = sadd.s32 %s88, 1
    %s90 = scalar_select %p87, %s88, %s89
    %p93 = pneg %p87
    %p94 = scmp.eq.s32.totalorder %s8, 1
    %p95 = por %p93, %p94
    %p96 = scmp.ne.s32.totalorder %s88, %s91
    %p97 = scmp.eq.s32.totalorder %s8, 0
    %p98 = por %p96, %p97
    %p99 = scmp.ne.s32.totalorder %s88, %s91
    %p100 = scmp.eq.s32.totalorder %s13, 1
    %p101 = por %p99, %p100
    %p102 = scmp.ne.s32.totalorder %s91, %s92
    %p103 = scmp.eq.s32.totalorder %s13, 0
    %p104 = por %p102, %p103
    %p105 = scmp.ne.s32.totalorder %s91, %s92
    %p106 = scmp.eq.s32.totalorder %s14, 1
    %p107 = por %p105, %p106
    %p109 = scmp.ne.s32.totalorder %s92, %s108
    %p110 = scmp.eq.s32.totalorder %s14, 0
    %p111 = por %p109, %p110
    %p112 = scmp.le.s32.totalorder 1, %s8
    %p113 = scmp.lt.s32.totalorder %s8, 3
    %p114 = pnand %p112, %p113
    %p115 = pneg %p114
    // Predicated region
    $region9: #{tpu_custom_call.1} parent=5 // pred_check
      _
    $region10: #{tpu_custom_call.1} parent=5 // pred_check_branch
      %117 = sbr.rel (%p114) target = $region12
    $region11: #{tpu_custom_call.1} parent=5 // pred_region
      %s118 = ssub.s32 %s8, 1
    $region12: #{tpu_custom_call.1} parent=5 // pred_fallthru
      _
    %p119 = scmp.lt.s32.totalorder %s8, 2
    // Predicated region
    $region13: #{tpu_custom_call.1} parent=5 // pred_check
      %p120 = pneg %p119
    $region14: #{tpu_custom_call.1} parent=5 // pred_check_branch
      %122 = sbr.rel (%p120) target = $region16
    $region15: #{tpu_custom_call.1} parent=5 // pred_region
      // Predicated region
      $region17: #{tpu_custom_call.1} parent=15 // pred_check
        %p123 = pneg %p42
      $region18: #{tpu_custom_call.1} parent=15 // pred_check_branch
        %125 = sbr.rel (%p123) target = $region20
      $region19: #{tpu_custom_call.1} parent=15 // pred_region
        %s126 = smul.u32 2, %s16
        %p127 = scmp.lt.s32.totalorder %s15, 1
        %s128 = scalar_select %p127, %s15, 1
        %p129 = scmp.lt.s32.totalorder %s126, 1
        %s130 = scalar_select %p129, %s126, 1
        %s131 = smul.addr %s128, 2
        %s132 = sadd.s32 %s130, %s131
        %s133 = smul.addr %s132, 4
        %s134 = scalar_lea.vmem %s0, %s133
        %s135 = smul.u32 2, %s16
      $region20: #{tpu_custom_call.1} parent=15 // pred_fallthru
        _
      // Predicated region
      $region21: #{tpu_custom_call.1} parent=15 // pred_check
        %p136 = pneg %p70
      $region22: #{tpu_custom_call.1} parent=15 // pred_check_branch
        %138 = sbr.rel (%p136) target = $region24
      $region23: #{tpu_custom_call.1} parent=15 // pred_region
        %s139 = smul.u32 2, %s16
        %p140 = scmp.lt.s32.totalorder %s15, 1
        %s141 = scalar_select %p140, %s15, 1
        %p142 = scmp.lt.s32.totalorder %s139, 1
        %s143 = scalar_select %p142, %s139, 1
        %s144 = smul.addr %s141, 2
        %s145 = sadd.s32 %s143, %s144
        %s146 = smul.addr %s145, 8
        %s147 = scalar_lea.vmem %s1, %s146
        %s148 = smul.u32 2, %s16
      $region24: #{tpu_custom_call.1} parent=15 // pred_fallthru
        _
    $region16: #{tpu_custom_call.1} parent=5 // pred_fallthru
      _
    %p149 = scmp.le.s32.totalorder 1, %s8
    %p150 = scmp.lt.s32.totalorder %s8, 3
    %p151 = pnand %p149, %p150
    %p152 = pneg %p151
    // Predicated region
    $region25: #{tpu_custom_call.1} parent=5 // pred_check
      _
    $region26: #{tpu_custom_call.1} parent=5 // pred_check_branch
      %154 = sbr.rel (%p151) target = $region28
    $region27: #{tpu_custom_call.1} parent=5 // pred_region
      %s155 = ssub.s32 %s8, 1
      %s156 = smul.u32 2, %s18
      %p157 = scmp.lt.s32.totalorder %s17, 1
      %s158 = scalar_select %p157, %s17, 1
      %p159 = scmp.lt.s32.totalorder %s156, 1
      %s160 = scalar_select %p159, %s156, 1
      %s161 = smul.addr %s158, 2
      %s162 = sadd.s32 %s160, %s161
      %s163 = smul.addr %s162, 4
      %s164 = scalar_lea.vmem %s0, %s163
      %p165 = pneg %p48
      %p166 = pneg %p45
      %s167 = smul.u32 2, %s18
      %p168 = scmp.lt.s32.totalorder %s17, 1
      %s169 = scalar_select %p168, %s17, 1
      %p170 = scmp.lt.s32.totalorder %s167, 1
      %s171 = scalar_select %p170, %s167, 1
      %s172 = smul.addr %s169, 2
      %s173 = sadd.s32 %s171, %s172
      %s174 = smul.addr %s173, 8
      %s175 = scalar_lea.vmem %s1, %s174
      %p176 = pneg %p76
      %p177 = pneg %p73
      %p178 = pneg %p104
      %p179 = pneg %p101
      %s180 = smul.u32 2, %s18
      %p181 = scmp.lt.s32.totalorder %s17, 1
      %s182 = scalar_select %p181, %s17, 1
      %p183 = scmp.lt.s32.totalorder %s180, 1
      %s184 = scalar_select %p183, %s180, 1
      %s185 = smul.addr %s182, 4
      %s186 = sadd.s32 %s184, %s185
      %s187 = smul.addr %s186, 8
      %s188 = scalar_lea.vmem %s2, %s187
      %s189 = smul.u32 2, %s18
      %p190 = scmp.lt.s32.totalorder %s17, 1
      %s191 = scalar_select %p190, %s17, 1
      %p192 = scmp.lt.s32.totalorder %s189, 1
      %s193 = scalar_select %p192, %s189, 1
      %s194 = smul.addr %s191, 2
      %s195 = sadd.s32 %s193, %s194
      %s196 = smul.addr %s195, 4
      %s197 = scalar_lea.vmem %s0, %s196
      %s198 = smul.u32 2, %s18
      %s199 = smul.u32 2, %s18
      %p200 = scmp.lt.s32.totalorder %s17, 1
      %s201 = scalar_select %p200, %s17, 1
      %p202 = scmp.lt.s32.totalorder %s199, 1
      %s203 = scalar_select %p202, %s199, 1
      %s204 = smul.addr %s201, 2
      %s205 = sadd.s32 %s203, %s204
      %s206 = smul.addr %s205, 8
      %s207 = scalar_lea.vmem %s1, %s206
      %s208 = smul.u32 2, %s18
      %s209 = smul.u32 2, %s18
      %p210 = scmp.lt.s32.totalorder %s17, 1
      %s211 = scalar_select %p210, %s17, 1
      %p212 = scmp.lt.s32.totalorder %s209, 1
      %s213 = scalar_select %p212, %s209, 1
      %s214 = smul.addr %s211, 4
      %s215 = sadd.s32 %s213, %s214
      %s216 = smul.addr %s215, 8
      %s217 = scalar_lea.vmem %s2, %s216
      %s218 = smul.u32 2, %s18
      %v219 = vld [vmem:[%s197] sm:$0xff]
      %v221 = vcombine.high %v219, %v219
      %223 = vst [vmem:[%s217] sm:$0xf] %v219
      %224 = vst [vmem:[%s217 + $0x8] sm:$0xf] %v221
      %v225 = vld [vmem:[%s207] sm:$0x3f]
      %v226 = vld [vmem:[%s207 + $0x8] sm:$0x3f]
      %v229 = vrot.slane %v225, 4
      %v230 = vrot.slane %v226, 4
      %233 = vst [vmem:[%s217] sm:$0xf0] %v229
      %234 = vst [vmem:[%s217 + $0x8] sm:$0xf0] %v230
      %235 = vst [vmem:[%s217 + $0x10] sm:$0x3] %v229
      %236 = vst [vmem:[%s217 + $0x18] sm:$0x3] %v230
      %s237 = smul.u32 2, %s18
      %p238 = scmp.lt.s32.totalorder %s17, 1
      %s239 = scalar_select %p238, %s17, 1
      %p240 = scmp.lt.s32.totalorder %s237, 1
      %s241 = scalar_select %p240, %s237, 1
      %s242 = smul.addr %s239, 4
      %s243 = sadd.s32 %s241, %s242
      %s244 = smul.addr %s243, 8
      %s245 = scalar_lea.vmem %s2, %s244
      // Predicated region
      $region29: #{tpu_custom_call.1} parent=27 // pred_check
        %p246 = pneg %p101
      $region30: #{tpu_custom_call.1} parent=27 // pred_check_branch
        %248 = sbr.rel (%p246) target = $region32
      $region31: #{tpu_custom_call.1} parent=27 // pred_region
        %s249 = smul.u32 2, %s18
      $region32: #{tpu_custom_call.1} parent=27 // pred_fallthru
        _
    $region28: #{tpu_custom_call.1} parent=5 // pred_fallthru
      _
    %p250 = scmp.le.s32.totalorder 2, %s8
    // Predicated region
    $region33: #{tpu_custom_call.1} parent=5 // pred_check
      %p251 = pneg %p250
    $region34: #{tpu_custom_call.1} parent=5 // pred_check_branch
      %253 = sbr.rel (%p251) target = $region36
    $region35: #{tpu_custom_call.1} parent=5 // pred_region
      %s254 = ssub.s32 %s8, 2
      // Predicated region
      $region37: #{tpu_custom_call.1} parent=35 // pred_check
        %p255 = pneg %p107
      $region38: #{tpu_custom_call.1} parent=35 // pred_check_branch
        %257 = sbr.rel (%p255) target = $region40
      $region39: #{tpu_custom_call.1} parent=35 // pred_region
        %s258 = smul.u32 2, %s20
        %p259 = scmp.lt.s32.totalorder %s19, 1
        %s260 = scalar_select %p259, %s19, 1
        %p261 = scmp.lt.s32.totalorder %s258, 1
        %s262 = scalar_select %p261, %s258, 1
        %s263 = smul.addr %s260, 4
        %s264 = sadd.s32 %s262, %s263
        %s265 = smul.addr %s264, 8
        %s266 = scalar_lea.vmem %s2, %s265
      $region40: #{tpu_custom_call.1} parent=35 // pred_fallthru
        _
    $region36: #{tpu_custom_call.1} parent=5 // pred_fallthru
      _
  $region6: #{tpu_custom_call.1} parent=0 // loop_footer
    %s12 = sadd.s32 1, %s8
  $region7: #{tpu_custom_call.1} parent=0 // loop_footer_branch
    %7 = sbr.rel target = $region3
  $region8: #{tpu_custom_call.1} parent=0 // loop_exit
    _

</llo_original>
